<compile_context>
chip_gen: v6e
topology: v6e:2x2x1
jax: 0.10.0
libtpu: 0.0.40
codegen_flags: <defaults>
</compile_context>

<pallas_src>
import functools

import jax
import jax.numpy as jnp
from jax import lax
from jax.experimental import pallas as pl
from jax.experimental.pallas import tpu as pltpu


NEG_BIG = -1.0e30  # finite "-inf" sentinel (avoids inf-inf -> nan)


def _round_up(x, m):
    return ((x + m - 1) // m) * m


def _nt_xent_lse_kernel(lhs_ref, rhsT_ref, lse_ref, m_sc, l_sc, *, n_valid):
    """Streaming logsumexp_{j != i} sim[i, j] over column blocks.

    lhs_ref : (TM, Dp) bf16, row block of zn / temperature
    rhsT_ref: (Dp, TN) bf16, column block of zn^T
    lse_ref : (TM, 1)  f32 output, written on the last column block
    m_sc,l_sc: (TM,1)  f32 running max / running sum scratch
    """
    tm = lhs_ref.shape[0]
    tn = rhsT_ref.shape[1]
    ri = pl.program_id(0)
    ci = pl.program_id(1)

    @pl.when(ci == 0)
    def _():
        m_sc[...] = jnp.full((tm, 1), NEG_BIG, jnp.float32)
        l_sc[...] = jnp.zeros((tm, 1), jnp.float32)

    # [TM, Dp] x [Dp, TN] on the MXU: bf16 inputs, f32 accumulation.
    sim = jnp.dot(lhs_ref[...], rhsT_ref[...], preferred_element_type=jnp.float32)

    # Mask the diagonal (self-similarity) and padded columns in one select.
    rg = ri * tm + lax.broadcasted_iota(jnp.int32, (tm, tn), 0)
    cg = ci * tn + lax.broadcasted_iota(jnp.int32, (tm, tn), 1)
    invalid = jnp.logical_or(rg == cg, cg >= n_valid)
    sim = jnp.where(invalid, jnp.float32(NEG_BIG), sim)

    # Online logsumexp update (flash-attention style).
    m_prev = m_sc[...]
    m_new = jnp.maximum(m_prev, jnp.max(sim, axis=-1, keepdims=True))
    alpha = jnp.exp(m_prev - m_new)
    p = jnp.exp(sim - m_new)
    l_sc[...] = alpha * l_sc[...] + jnp.sum(p, axis=-1, keepdims=True)
    m_sc[...] = m_new

    @pl.when(ci == pl.num_programs(1) - 1)
    def _():
        lse_ref[...] = m_sc[...] + jnp.log(l_sc[...])


def nt_xent_loss(z_i, z_j, temperature, batch_size, world_size,
                 *, block=256, eps=1e-8):
    bw = batch_size * world_size
    n = 2 * bw
    assert z_i.shape == z_j.shape and z_i.shape[0] == bw
    d = z_i.shape[-1]

    # ---- one-time O(N*D) prep in plain XLA -------------------------------
    z = jnp.concatenate([z_i, z_j], axis=0).astype(jnp.float32)
    sumsq = jnp.sum(z * z, axis=-1, keepdims=True)
    inv_norm = lax.rsqrt(jnp.maximum(sumsq, jnp.float32(eps) ** 2))
    zn = z * inv_norm
    lhs = (zn * jnp.float32(1.0 / temperature)).astype(jnp.bfloat16)  # 1/T folded in
    rhs = zn.astype(jnp.bfloat16)

    # Positive logits via row-wise dot of the two halves (same bf16 operands
    # the kernel's matmul sees), accumulated in f32.
    lhs32 = lhs.astype(jnp.float32)
    rhs32 = rhs.astype(jnp.float32)
    pos_top = jnp.sum(lhs32[:bw] * rhs32[bw:], axis=-1)   # sim[i, i+bw], i <  bw
    pos_bot = jnp.sum(lhs32[bw:] * rhs32[:bw], axis=-1)   # sim[i, i-bw], i >= bw
    pos_sum = jnp.sum(pos_top) + jnp.sum(pos_bot)

    # ---- tiling / padding -------------------------------------------------
    t_blk = max(128, min(int(block), _round_up(n, 128)))   # MXU/lane aligned
    n_pad = _round_up(n, t_blk)
    d_pad = _round_up(d, 128)
    lhs_p = jnp.pad(lhs, ((0, n_pad - n), (0, d_pad - d)))
    rhs_p = jnp.pad(rhs, ((0, n_pad - n), (0, d_pad - d)))
    rhsT = rhs_p.T                                          # (Dp, Np), pre-transposed

    grid = (n_pad // t_blk, n_pad // t_blk)
    num_row_blocks = grid[0]

    cost = pl.CostEstimate(
        flops=2 * n_pad * n_pad * d_pad,
        transcendentals=n_pad * n_pad,
        bytes_accessed=(n_pad * d_pad * 2                       # lhs (resident per row blk)
                        + num_row_blocks * n_pad * d_pad * 2    # rhsT re-streamed per row blk
                        + n_pad * 4),                           # lse output
    )

    kernel = functools.partial(_nt_xent_lse_kernel, n_valid=n)

    lse = pl.pallas_call(
        kernel,
        out_shape=jax.ShapeDtypeStruct((n_pad, 1), jnp.float32),
        grid_spec=pltpu.PrefetchScalarGridSpec(
            num_scalar_prefetch=0,
            grid=grid,
            in_specs=[
                pl.BlockSpec((t_blk, d_pad), lambda i, j: (i, 0)),   # zn / T rows
                pl.BlockSpec((d_pad, t_blk), lambda i, j: (0, j)),   # zn^T cols
            ],
            out_specs=pl.BlockSpec((t_blk, 1), lambda i, j: (i, 0)),
            scratch_shapes=[
                pltpu.VMEM((t_blk, 1), jnp.float32),   # running max m
                pltpu.VMEM((t_blk, 1), jnp.float32),   # running sum l
            ],
        ),
        compiler_params=pltpu.CompilerParams(
            dimension_semantics=("parallel", "arbitrary"),
            vmem_limit_bytes=32 * 1024 * 1024,   # fits v7x's 64 MiB with headroom
        ),
        cost_estimate=cost,
    )(lhs_p, rhsT)

    lse_sum = jnp.sum(lse[:n, 0])                # drop padded rows
    return (lse_sum - pos_sum) / jnp.float32(n)  # CE(sum) / N


def nt_xent_reference(z_i, z_j, temperature):
    # Pure-JAX f32 reference mirroring the PyTorch forward.
    z = jnp.concatenate([z_i, z_j], axis=0).astype(jnp.float32)
    n = z.shape[0]
    bw = n // 2
    zn = z / jnp.maximum(jnp.linalg.norm(z, axis=-1, keepdims=True), 1e-8)
    sim = (zn @ zn.T) / temperature
    idx = jnp.arange(n)
    pos = sim[idx, (idx + bw) % n]
    sim_nd = jnp.where(jnp.eye(n, dtype=bool), -jnp.inf, sim)
    lse = jax.scipy.special.logsumexp(sim_nd, axis=-1)
    return jnp.sum(lse - pos) / n


if __name__ == "__main__":
    # Small demo matching the module signature.
    batch_size = 4
    world_size = 1
    hidden = 32
    temperature = 0.5

    key = jax.random.PRNGKey(0)
    k1, k2 = jax.random.split(key)
    z_i = jax.random.normal(k1, (batch_size * world_size, hidden), dtype=jnp.float32)
    z_j = jax.random.normal(k2, (batch_size * world_size, hidden), dtype=jnp.float32)

    loss = nt_xent_loss(z_i, z_j, temperature, batch_size, world_size)
    loss = jax.block_until_ready(loss)
    ref = nt_xent_reference(z_i, z_j, temperature)
    assert jnp.allclose(loss, ref, atol=2e-2, rtol=2e-2), (loss, ref)

    # Second check exercising the multi-block grid (2x2), column padding and
    # the off-diagonal / diagonal block masking paths (bf16 matmul tolerance).
    b2, h2 = 100, 48
    k3, k4 = jax.random.split(k2)
    z_i2 = jax.random.normal(k3, (b2, h2), dtype=jnp.float32)
    z_j2 = jax.random.normal(k4, (b2, h2), dtype=jnp.float32)
    loss2 = nt_xent_loss(z_i2, z_j2, temperature, b2, 1, block=128)
    loss2 = jax.block_until_ready(loss2)
    ref2 = nt_xent_reference(z_i2, z_j2, temperature)
    assert jnp.allclose(loss2, ref2, atol=2e-2, rtol=2e-2), (loss2, ref2)

    print("KERNEL_OK")
</pallas_src>

<mosaic_0001>
module attributes {stable_mosaic.version = 11 : i64} {
  func.func @_nt_xent_lse_kernel(%arg0: i32, %arg1: i32, %arg2: memref<128x128xbf16, #tpu.memory_space<vmem>>, %arg3: memref<128x128xbf16, #tpu.memory_space<vmem>>, %arg4: memref<128x1xf32, #tpu.memory_space<vmem>>, %arg5: memref<128x1xf32, #tpu.memory_space<vmem>>, %arg6: memref<128x1xf32, #tpu.memory_space<vmem>>) attributes {dimension_semantics = [#tpu.dimension_semantics<parallel>, #tpu.dimension_semantics<arbitrary>], iteration_bounds = array<i64: 1, 1>, scalar_prefetch = 0 : i64, scratch_operands = 2 : i64, tpu.core_type = #tpu.core_type<tc>, window_params = [{transform_indices = @transform_0, window_bounds = array<i64: 128, 128>}, {transform_indices = @transform_1, window_bounds = array<i64: 128, 128>}, {transform_indices = @transform_2, window_bounds = array<i64: 128, 1>}]} {
    %c0_i32 = arith.constant 0 : i32
    %0 = arith.cmpi eq, %arg1, %c0_i32 : i32
    %1 = arith.extui %0 : i1 to i32
    %c0_i32_0 = arith.constant 0 : i32
    %2 = arith.cmpi ne, %1, %c0_i32_0 : i32
    scf.if %2 {
      %cst_18 = arith.constant -1.000000e+30 : f32
      %39 = vector.broadcast %cst_18 : f32 to vector<128x1xf32>
      %c0_19 = arith.constant 0 : index
      %c0_20 = arith.constant 0 : index
      %40 = vector.load %arg5[%c0_19, %c0_20] : memref<128x1xf32, #tpu.memory_space<vmem>>, vector<128x1xf32>
      tpu.vector_store %arg5[%c0_19, %c0_20], %39 {strides = array<i32>} : memref<128x1xf32, #tpu.memory_space<vmem>>, vector<128x1xf32>,
      %cst_21 = arith.constant 0.000000e+00 : f32
      %41 = vector.broadcast %cst_21 : f32 to vector<128x1xf32>
      %c0_22 = arith.constant 0 : index
      %c0_23 = arith.constant 0 : index
      %42 = vector.load %arg6[%c0_22, %c0_23] : memref<128x1xf32, #tpu.memory_space<vmem>>, vector<128x1xf32>
      tpu.vector_store %arg6[%c0_22, %c0_23], %41 {strides = array<i32>} : memref<128x1xf32, #tpu.memory_space<vmem>>, vector<128x1xf32>,
    } else {
    }
    %c0 = arith.constant 0 : index
    %c0_1 = arith.constant 0 : index
    %3 = vector.load %arg2[%c0, %c0_1] : memref<128x128xbf16, #tpu.memory_space<vmem>>, vector<128x128xbf16>
    %c0_2 = arith.constant 0 : index
    %c0_3 = arith.constant 0 : index
    %4 = vector.load %arg3[%c0_2, %c0_3] : memref<128x128xbf16, #tpu.memory_space<vmem>>, vector<128x128xbf16>
    %cst = arith.constant dense<0.000000e+00> : vector<128x128xf32>
    %5 = tpu.matmul %3, %4, %cst {dimension_numbers = #tpu.dot_dimension_numbers<[1], [0], [0], [1], [0, 0, 1, 1], [], []>} : vector<128x128xbf16>, vector<128x128xbf16>, vector<128x128xf32> -> vector<128x128xf32>
    %c128_i32 = arith.constant 128 : i32
    %6 = arith.muli %arg0, %c128_i32 : i32
    %7 = tpu.iota {dimensions = array<i32: 0>} : vector<128x128xi32>
    %8 = vector.broadcast %6 : i32 to vector<128x128xi32>
    %9 = arith.addi %8, %7 : vector<128x128xi32>
    %c128_i32_4 = arith.constant 128 : i32
    %10 = arith.muli %arg1, %c128_i32_4 : i32
    %11 = tpu.iota {dimensions = array<i32: 1>} : vector<128x128xi32>
    %12 = vector.broadcast %10 : i32 to vector<128x128xi32>
    %13 = arith.addi %12, %11 : vector<128x128xi32>
    %14 = arith.cmpi eq, %9, %13 : vector<128x128xi32>
    %c8_i32 = arith.constant 8 : i32
    %15 = vector.broadcast %c8_i32 : i32 to vector<128x128xi32>
    %16 = arith.cmpi sge, %13, %15 : vector<128x128xi32>
    %17 = arith.ori %14, %16 : vector<128x128xi1>
    %cst_5 = arith.constant -1.000000e+30 : f32
    %18 = vector.broadcast %cst_5 : f32 to vector<128x128xf32>
    %19 = arith.select %17, %18, %5 : vector<128x128xi1>, vector<128x128xf32>
    %c0_6 = arith.constant 0 : index
    %c0_7 = arith.constant 0 : index
    %20 = vector.load %arg5[%c0_6, %c0_7] : memref<128x1xf32, #tpu.memory_space<vmem>>, vector<128x1xf32>
    %cst_8 = arith.constant dense<0xFF800000> : vector<128xf32>
    %21 = vector.multi_reduction <maximumf>, %19, %cst_8 [1] : vector<128x128xf32> to vector<128xf32>
    %22 = vector.shape_cast %21 : vector<128xf32> to vector<128x1xf32>
    %23 = arith.maximumf %20, %22 : vector<128x1xf32>
    %24 = arith.subf %20, %23 : vector<128x1xf32>
    %25 = math.exp %24 : vector<128x1xf32>
    %26 = vector.broadcast %23 : vector<128x1xf32> to vector<128x128xf32>
    %27 = arith.subf %19, %26 : vector<128x128xf32>
    %28 = math.exp %27 : vector<128x128xf32>
    %c0_9 = arith.constant 0 : index
    %c0_10 = arith.constant 0 : index
    %29 = vector.load %arg6[%c0_9, %c0_10] : memref<128x1xf32, #tpu.memory_space<vmem>>, vector<128x1xf32>
    %30 = arith.mulf %25, %29 : vector<128x1xf32>
    %cst_11 = arith.constant dense<0.000000e+00> : vector<128xf32>
    %31 = vector.multi_reduction <add>, %28, %cst_11 [1] : vector<128x128xf32> to vector<128xf32>
    %32 = vector.shape_cast %31 : vector<128xf32> to vector<128x1xf32>
    %33 = arith.addf %30, %32 : vector<128x1xf32>
    %c0_12 = arith.constant 0 : index
    %c0_13 = arith.constant 0 : index
    %34 = vector.load %arg6[%c0_12, %c0_13] : memref<128x1xf32, #tpu.memory_space<vmem>>, vector<128x1xf32>
    tpu.vector_store %arg6[%c0_12, %c0_13], %33 {strides = array<i32>} : memref<128x1xf32, #tpu.memory_space<vmem>>, vector<128x1xf32>,
    %c0_14 = arith.constant 0 : index
    %c0_15 = arith.constant 0 : index
    %35 = vector.load %arg5[%c0_14, %c0_15] : memref<128x1xf32, #tpu.memory_space<vmem>>, vector<128x1xf32>
    tpu.vector_store %arg5[%c0_14, %c0_15], %23 {strides = array<i32>} : memref<128x1xf32, #tpu.memory_space<vmem>>, vector<128x1xf32>,
    %c0_i32_16 = arith.constant 0 : i32
    %36 = arith.cmpi eq, %arg1, %c0_i32_16 : i32
    %37 = arith.extui %36 : i1 to i32
    %c0_i32_17 = arith.constant 0 : i32
    %38 = arith.cmpi ne, %37, %c0_i32_17 : i32
    scf.if %38 {
      %c0_18 = arith.constant 0 : index
      %c0_19 = arith.constant 0 : index
      %39 = vector.load %arg5[%c0_18, %c0_19] : memref<128x1xf32, #tpu.memory_space<vmem>>, vector<128x1xf32>
      %c0_20 = arith.constant 0 : index
      %c0_21 = arith.constant 0 : index
      %40 = vector.load %arg6[%c0_20, %c0_21] : memref<128x1xf32, #tpu.memory_space<vmem>>, vector<128x1xf32>
      %41 = math.log %40 : vector<128x1xf32>
      %42 = arith.addf %39, %41 : vector<128x1xf32>
      %c0_22 = arith.constant 0 : index
      %c0_23 = arith.constant 0 : index
      %43 = vector.load %arg4[%c0_22, %c0_23] : memref<128x1xf32, #tpu.memory_space<vmem>>, vector<128x1xf32>
      tpu.vector_store %arg4[%c0_22, %c0_23], %42 {strides = array<i32>} : memref<128x1xf32, #tpu.memory_space<vmem>>, vector<128x1xf32>,
    } else {
    }
    return
  }
  func.func @transform_0(%arg0: i32, %arg1: i32) -> (i32, i32) {
    %c0_i32 = arith.constant 0 : i32
    %c0_i32_0 = arith.constant 0 : i32
    return %arg0, %c0_i32 : i32, i32
  }
  func.func @transform_1(%arg0: i32, %arg1: i32) -> (i32, i32) {
    %c0_i32 = arith.constant 0 : i32
    %c0_i32_0 = arith.constant 0 : i32
    return %c0_i32, %arg1 : i32, i32
  }
  func.func @transform_2(%arg0: i32, %arg1: i32) -> (i32, i32) {
    %c0_i32 = arith.constant 0 : i32
    %c0_i32_0 = arith.constant 0 : i32
    return %arg0, %c0_i32 : i32, i32
  }
}

</mosaic_0001>

<llo_original>
// kernel: tpu_custom_call.1
$region0: #{tpu_custom_call.1}
  #allocation0 [shape = 'u32[]', space=smem, size = 0x4, offset = 0x4, fixed_abs, tag = 'smem constant byte address 0x4 - core index']
  #allocation1 [shape = 'u32[144,128]{1,0:T(1,128)}', space=vmem, size = 0x12000, scoped, tag = 'internal scratch']
  #allocation2 [shape = 'f32[128,1]{1,0:T(8,128)}', space=vmem, size = 0x10000, scoped, tag = 'scratch operand']
  #allocation3 [shape = 'f32[128,1]{1,0:T(8,128)}', space=vmem, size = 0x10000, scoped, tag = 'scratch operand']
  %s0 = inlined_call_operand.hbm [shape: bf16[128,128], index: 0, kind: input, shape index: {}]
  %s1 = inlined_call_operand.hbm [shape: bf16[128,128], index: 1, kind: input, shape index: {}]
  %s2 = inlined_call_operand.vmem [shape: f32[128,1], index: 2, kind: output, shape index: {}]
  %s3 = sld [smem:[#allocation0]]
  $region34: #{tpu_custom_call.1} parent=0
    _
  %s5 = ssub.s32 1, %s3
  %s6 = scalar_select 0, %s5, %s3
  $region1: #{tpu_custom_call.1} parent=0
    #allocation4 [shape = 'u8[32768]{0}', space=vmem, size = 0x8000, scoped, tag = 'input window, operand 0, single buffered']
    #allocation5 [shape = 's32[1]{0}', space=sflag, size = 0x4, scoped, tag = 'scoped memory for tpu_custom_call.1']
    #allocation6 [shape = 'u8[32768]{0}', space=vmem, size = 0x8000, scoped, tag = 'input window, operand 1, single buffered']
    #allocation7 [shape = 's32[1]{0}', space=sflag, size = 0x4, scoped, tag = 'scoped memory for tpu_custom_call.1']
    %7 = vsyncpa [#allocation5], 0
    %8 = vsyncpa [#allocation7], 0
    // Predicated region
    $region2: #{tpu_custom_call.1} parent=1 // pred_check
      _
    $region3: #{tpu_custom_call.1} parent=1 // pred_check_branch
      %10 = sbr.rel (0) target = $region5
    $region4: #{tpu_custom_call.1} parent=1 // pred_region
      %s12 = ssub.s32 1024, 1024
      %13 = vsyncadd [#allocation5], %s12
      %s14 = sshll.u32 [#allocation4], 4
      %s15 = int_to_ptr.vmem [resolvable:$true] %s14
      %20 = dma.hbm_to_vmem [thread:$0]  %s0, 1024, %s15, [#allocation5], 64, 64, 4
    $region5: #{tpu_custom_call.1} parent=1 // pred_fallthru
      _
    // Predicated region
    $region6: #{tpu_custom_call.1} parent=1 // pred_check
      _
    $region7: #{tpu_custom_call.1} parent=1 // pred_check_branch
      %22 = sbr.rel (0) target = $region9
    $region8: #{tpu_custom_call.1} parent=1 // pred_region
      %s24 = ssub.s32 1024, 1024
      %25 = vsyncadd [#allocation7], %s24
      %s26 = sshll.u32 [#allocation6], 4
      %s27 = int_to_ptr.vmem [resolvable:$true] %s26
      %32 = dma.hbm_to_vmem [thread:$0]  %s1, 1024, %s27, [#allocation7], 64, 64, 4
    $region9: #{tpu_custom_call.1} parent=1 // pred_fallthru
      _
    // Predicated region
    $region10: #{tpu_custom_call.1} parent=1 // pred_check
      _
    $region11: #{tpu_custom_call.1} parent=1 // pred_check_branch
      %34 = sbr.rel (0) target = $region13
    $region12: #{tpu_custom_call.1} parent=1 // pred_region
      %35 = dma.done [#allocation5], 1024
    $region13: #{tpu_custom_call.1} parent=1 // pred_fallthru
      _
    // Predicated region
    $region14: #{tpu_custom_call.1} parent=1 // pred_check
      _
    $region15: #{tpu_custom_call.1} parent=1 // pred_check_branch
      %37 = sbr.rel (0) target = $region17
    $region16: #{tpu_custom_call.1} parent=1 // pred_region
      %38 = dma.done [#allocation7], 1024
    $region17: #{tpu_custom_call.1} parent=1 // pred_fallthru
      _
    %p40 = scmp.eq.s32.totalorder 0, 0
    // Predicated region
    $region18: #{tpu_custom_call.1} parent=1 // pred_check
      %p41 = pneg %p40
    $region19: #{tpu_custom_call.1} parent=1 // pred_check_branch
      %43 = sbr.rel (%p41) target = $region21
    $region20: #{tpu_custom_call.1} parent=1 // pred_region
      %vm44 = vcmask 7168
      %45 = vst.msk [vmem:[#allocation2] sm:$0xff] %vm44, -1e+30
      %46 = vst.msk [vmem:[#allocation2 + $0x8] sm:$0xff] %vm44, -1e+30
      %47 = vst.msk [vmem:[#allocation2 + $0x10] sm:$0xff] %vm44, -1e+30
      %48 = vst.msk [vmem:[#allocation2 + $0x18] sm:$0xff] %vm44, -1e+30
      %49 = vst.msk [vmem:[#allocation2 + $0x20] sm:$0xff] %vm44, -1e+30
      %50 = vst.msk [vmem:[#allocation2 + $0x28] sm:$0xff] %vm44, -1e+30
      %51 = vst.msk [vmem:[#allocation2 + $0x30] sm:$0xff] %vm44, -1e+30
      %52 = vst.msk [vmem:[#allocation2 + $0x38] sm:$0xff] %vm44, -1e+30
      %53 = vst.msk [vmem:[#allocation2 + $0x40] sm:$0xff] %vm44, -1e+30
      %54 = vst.msk [vmem:[#allocation2 + $0x48] sm:$0xff] %vm44, -1e+30
      %55 = vst.msk [vmem:[#allocation2 + $0x50] sm:$0xff] %vm44, -1e+30
      %56 = vst.msk [vmem:[#allocation2 + $0x58] sm:$0xff] %vm44, -1e+30
      %57 = vst.msk [vmem:[#allocation2 + $0x60] sm:$0xff] %vm44, -1e+30
      %58 = vst.msk [vmem:[#allocation2 + $0x68] sm:$0xff] %vm44, -1e+30
      %59 = vst.msk [vmem:[#allocation2 + $0x70] sm:$0xff] %vm44, -1e+30
      %60 = vst.msk [vmem:[#allocation2 + $0x78] sm:$0xff] %vm44, -1e+30
      %61 = vst.msk [vmem:[#allocation3] sm:$0xff] %vm44, 0.0
      %62 = vst.msk [vmem:[#allocation3 + $0x8] sm:$0xff] %vm44, 0.0
      %63 = vst.msk [vmem:[#allocation3 + $0x10] sm:$0xff] %vm44, 0.0
      %64 = vst.msk [vmem:[#allocation3 + $0x18] sm:$0xff] %vm44, 0.0
      %65 = vst.msk [vmem:[#allocation3 + $0x20] sm:$0xff] %vm44, 0.0
      %66 = vst.msk [vmem:[#allocation3 + $0x28] sm:$0xff] %vm44, 0.0
      %67 = vst.msk [vmem:[#allocation3 + $0x30] sm:$0xff] %vm44, 0.0
      %68 = vst.msk [vmem:[#allocation3 + $0x38] sm:$0xff] %vm44, 0.0
      %69 = vst.msk [vmem:[#allocation3 + $0x40] sm:$0xff] %vm44, 0.0
      %70 = vst.msk [vmem:[#allocation3 + $0x48] sm:$0xff] %vm44, 0.0
      %71 = vst.msk [vmem:[#allocation3 + $0x50] sm:$0xff] %vm44, 0.0
      %72 = vst.msk [vmem:[#allocation3 + $0x58] sm:$0xff] %vm44, 0.0
      %73 = vst.msk [vmem:[#allocation3 + $0x60] sm:$0xff] %vm44, 0.0
      %74 = vst.msk [vmem:[#allocation3 + $0x68] sm:$0xff] %vm44, 0.0
      %75 = vst.msk [vmem:[#allocation3 + $0x70] sm:$0xff] %vm44, 0.0
      %76 = vst.msk [vmem:[#allocation3 + $0x78] sm:$0xff] %vm44, 0.0
    $region21: #{tpu_custom_call.1} parent=1 // pred_fallthru
      _
    %v77 = vld [vmem:[#allocation4] sm:$0xf]
    %v78 = vld [vmem:[#allocation4 + $0x4] sm:$0xf]
    %v79 = vld [vmem:[#allocation4 + $0x8] sm:$0xf]
    %v80 = vld [vmem:[#allocation4 + $0xc] sm:$0xf]
    %v81 = vld [vmem:[#allocation4 + $0x10] sm:$0xf]
    %v82 = vld [vmem:[#allocation4 + $0x14] sm:$0xf]
    %v83 = vld [vmem:[#allocation4 + $0x18] sm:$0xf]
    %v84 = vld [vmem:[#allocation4 + $0x1c] sm:$0xf]
    %v85 = vld [vmem:[#allocation4 + $0x20] sm:$0xf]
    %v86 = vld [vmem:[#allocation4 + $0x24] sm:$0xf]
    %v87 = vld [vmem:[#allocation4 + $0x28] sm:$0xf]
    %v88 = vld [vmem:[#allocation4 + $0x2c] sm:$0xf]
    %v89 = vld [vmem:[#allocation4 + $0x30] sm:$0xf]
    %v90 = vld [vmem:[#allocation4 + $0x34] sm:$0xf]
    %v91 = vld [vmem:[#allocation4 + $0x38] sm:$0xf]
    %v92 = vld [vmem:[#allocation4 + $0x3c] sm:$0xf]
    %v93 = vld [vmem:[#allocation6] sm:$0xf]
    %v94 = vld [vmem:[#allocation6 + $0x4] sm:$0xf]
    %v95 = vld [vmem:[#allocation6 + $0x8] sm:$0xf]
    %v96 = vld [vmem:[#allocation6 + $0xc] sm:$0xf]
    %v97 = vld [vmem:[#allocation6 + $0x10] sm:$0xf]
    %v98 = vld [vmem:[#allocation6 + $0x14] sm:$0xf]
    %v99 = vld [vmem:[#allocation6 + $0x18] sm:$0xf]
    %v100 = vld [vmem:[#allocation6 + $0x1c] sm:$0xf]
    %v101 = vld [vmem:[#allocation6 + $0x20] sm:$0xf]
    %v102 = vld [vmem:[#allocation6 + $0x24] sm:$0xf]
    %v103 = vld [vmem:[#allocation6 + $0x28] sm:$0xf]
    %v104 = vld [vmem:[#allocation6 + $0x2c] sm:$0xf]
    %v105 = vld [vmem:[#allocation6 + $0x30] sm:$0xf]
    %v106 = vld [vmem:[#allocation6 + $0x34] sm:$0xf]
    %v107 = vld [vmem:[#allocation6 + $0x38] sm:$0xf]
    %v108 = vld [vmem:[#allocation6 + $0x3c] sm:$0xf]
    %v125 = vunpack.c.l.b16 %v77
    %v126 = vunpack.c.l.b16 %v78
    %v127 = vunpack.c.l.b16 %v79
    %v128 = vunpack.c.l.b16 %v80
    %v129 = vunpack.c.l.b16 %v81
    %v130 = vunpack.c.l.b16 %v82
    %v131 = vunpack.c.l.b16 %v83
    %v132 = vunpack.c.l.b16 %v84
    %v133 = vunpack.c.l.b16 %v85
    %v134 = vunpack.c.l.b16 %v86
    %v135 = vunpack.c.l.b16 %v87
    %v136 = vunpack.c.l.b16 %v88
    %v137 = vunpack.c.l.b16 %v89
    %v138 = vunpack.c.l.b16 %v90
    %v139 = vunpack.c.l.b16 %v91
    %v140 = vunpack.c.l.b16 %v92
    %v141 = vpack.c.b16 %v126, %v125
    %v142 = vpack.c.b16 %v128, %v127
    %v143 = vpack.c.b16 %v130, %v129
    %v144 = vpack.c.b16 %v132, %v131
    %v145 = vpack.c.b16 %v134, %v133
    %v146 = vpack.c.b16 %v136, %v135
    %v147 = vpack.c.b16 %v138, %v137
    %v148 = vpack.c.b16 %v140, %v139
    %v173 = vunpack.c.l.b16 %v93
    %v174 = vunpack.c.l.b16 %v94
    %v175 = vunpack.c.l.b16 %v95
    %v176 = vunpack.c.l.b16 %v96
    %v177 = vunpack.c.l.b16 %v97
    %v178 = vunpack.c.l.b16 %v98
    %v179 = vunpack.c.l.b16 %v99
    %v180 = vunpack.c.l.b16 %v100
    %v181 = vunpack.c.l.b16 %v101
    %v182 = vunpack.c.l.b16 %v102
    %v183 = vunpack.c.l.b16 %v103
    %v184 = vunpack.c.l.b16 %v104
    %v185 = vunpack.c.l.b16 %v105
    %v186 = vunpack.c.l.b16 %v106
    %v187 = vunpack.c.l.b16 %v107
    %v188 = vunpack.c.l.b16 %v108
    %v189 = vpack.c.b16 %v174, %v173
    %v190 = vpack.c.b16 %v176, %v175
    %v191 = vpack.c.b16 %v178, %v177
    %v192 = vpack.c.b16 %v180, %v179
    %v193 = vpack.c.b16 %v182, %v181
    %v194 = vpack.c.b16 %v184, %v183
    %v195 = vpack.c.b16 %v186, %v185
    %v196 = vpack.c.b16 %v188, %v187
    %205 = vmatprep.subr.bf16.mxu0 0
    %206 = vmatpush1.bf16.msra.mxu0 %v196
    %207 = vmatprep.subr.bf16.mxu0 0
    %208 = vmatpush1.bf16.msra.mxu0 %v195
    %209 = vmatprep.subr.bf16.mxu0 0
    %210 = vmatpush1.bf16.msra.mxu0 %v194
    %211 = vmatprep.subr.bf16.mxu0 0
    %212 = vmatpush1.bf16.msra.mxu0 %v193
    %213 = vmatprep.subr.bf16.mxu0 0
    %214 = vmatpush1.bf16.msra.mxu0 %v192
    %215 = vmatprep.subr.bf16.mxu0 0
    %216 = vmatpush1.bf16.msra.mxu0 %v191
    %217 = vmatprep.subr.bf16.mxu0 0
    %218 = vmatpush1.bf16.msra.mxu0 %v190
    %219 = vmatprep.subr.bf16.mxu0 0
    %220 = vmatpush1.bf16.msra.mxu0 %v189
    %221 = vmatprep.subr.bf16.mxu0 0
    %222 = vmatpush2.bf16.msra.mxu0 0
    %223 = vmatprep.subr.bf16.mxu0 0
    %224 = vmatpush2.bf16.msra.mxu0 0
    %225 = vmatprep.subr.bf16.mxu0 0
    %226 = vmatpush2.bf16.msra.mxu0 0
    %227 = vmatprep.subr.bf16.mxu0 0
    %228 = vmatpush2.bf16.msra.mxu0 0
    %229 = vmatprep.subr.bf16.mxu0 0
    %230 = vmatpush2.bf16.msra.mxu0 0
    %231 = vmatprep.subr.bf16.mxu0 0
    %232 = vmatpush2.bf16.msra.mxu0 0
    %233 = vmatprep.subr.bf16.mxu0 0
    %234 = vmatpush2.bf16.msra.mxu0 0
    %235 = vmatprep.subr.bf16.mxu0 0
    %236 = vmatpush2.bf16.msra.mxu0 0
    %237 = vmatprep.mubr.bf16.mxu0 0
    %238 = vmatmul.mubr.bf16.gmra.mxu0 %v141
    %v239 = vpop.f32.mrf.mxu0
    %v240 = vadd.f32 0.0, %v239
    %v241 = vpop.f32.mrf.mxu0
    %v242 = vpop.f32.mrf.mxu0
    %v243 = vadd.f32 0.0, %v242
    %v244 = vpop.f32.mrf.mxu0
    %245 = vmatprep.mubr.bf16.mxu0 0
    %246 = vmatmul.mubr.bf16.gmra.mxu0 %v142
    %v247 = vpop.f32.mrf.mxu0
    %v248 = vadd.f32 0.0, %v247
    %v249 = vpop.f32.mrf.mxu0
    %v250 = vpop.f32.mrf.mxu0
    %v251 = vadd.f32 0.0, %v250
    %v252 = vpop.f32.mrf.mxu0
    %253 = vmatprep.mubr.bf16.mxu0 0
    %254 = vmatmul.mubr.bf16.gmra.mxu0 %v143
    %v255 = vpop.f32.mrf.mxu0
    %v256 = vadd.f32 0.0, %v255
    %v257 = vpop.f32.mrf.mxu0
    %v258 = vpop.f32.mrf.mxu0
    %v259 = vadd.f32 0.0, %v258
    %v260 = vpop.f32.mrf.mxu0
    %261 = vmatprep.mubr.bf16.mxu0 0
    %262 = vmatmul.mubr.bf16.gmra.mxu0 %v144
    %v263 = vpop.f32.mrf.mxu0
    %v264 = vadd.f32 0.0, %v263
    %v265 = vpop.f32.mrf.mxu0
    %v266 = vpop.f32.mrf.mxu0
    %v267 = vadd.f32 0.0, %v266
    %v268 = vpop.f32.mrf.mxu0
    %269 = vmatprep.mubr.bf16.mxu0 0
    %270 = vmatmul.mubr.bf16.gmra.mxu0 %v145
    %v271 = vpop.f32.mrf.mxu0
    %v272 = vadd.f32 0.0, %v271
    %v273 = vpop.f32.mrf.mxu0
    %v274 = vpop.f32.mrf.mxu0
    %v275 = vadd.f32 0.0, %v274
    %v276 = vpop.f32.mrf.mxu0
    %277 = vmatprep.mubr.bf16.mxu0 0
    %278 = vmatmul.mubr.bf16.gmra.mxu0 %v146
    %v279 = vpop.f32.mrf.mxu0
    %v280 = vadd.f32 0.0, %v279
    %v281 = vpop.f32.mrf.mxu0
    %v282 = vpop.f32.mrf.mxu0
    %v283 = vadd.f32 0.0, %v282
    %v284 = vpop.f32.mrf.mxu0
    %285 = vmatprep.mubr.bf16.mxu0 0
    %286 = vmatmul.mubr.bf16.gmra.mxu0 %v147
    %v287 = vpop.f32.mrf.mxu0
    %v288 = vadd.f32 0.0, %v287
    %v289 = vpop.f32.mrf.mxu0
    %v290 = vpop.f32.mrf.mxu0
    %v291 = vadd.f32 0.0, %v290
    %v292 = vpop.f32.mrf.mxu0
    %293 = vmatprep.mubr.bf16.mxu0 0
    %294 = vmatmul.mubr.bf16.gmra.mxu0 %v148
    %v295 = vpop.f32.mrf.mxu0
    %v296 = vadd.f32 0.0, %v295
    %v297 = vpop.f32.mrf.mxu0
    %v298 = vpop.f32.mrf.mxu0
    %v299 = vadd.f32 0.0, %v298
    %v300 = vpop.f32.mrf.mxu0
    %301 = vdwg.mxu0
    %s302 = smul.u32 0, 128
    %v303 = vlaneseq
    %v304 = vshrl.u32 %v303, 7
    %v305 = vadd.s32 %v304, 8
    %v306 = vadd.s32 %v304, 16
    %v307 = vadd.s32 %v304, 24
    %v308 = vadd.s32 %v304, 32
    %v309 = vadd.s32 %v304, 40
    %v310 = vadd.s32 %v304, 48
    %v311 = vadd.s32 %v304, 56
    %v312 = vadd.s32 %v304, 64
    %v313 = vadd.s32 %v304, 72
    %v314 = vadd.s32 %v304, 80
    %v315 = vadd.s32 %v304, 88
    %v316 = vadd.s32 %v304, 96
    %v317 = vadd.s32 %v304, 104
    %v318 = vadd.s32 %v304, 112
    %v319 = vadd.s32 %v304, 120
    %v320 = vstv %s302
    %v321 = vadd.s32 %v320, %v304
    %v322 = vadd.s32 %v320, %v305
    %v323 = vadd.s32 %v320, %v306
    %v324 = vadd.s32 %v320, %v307
    %v325 = vadd.s32 %v320, %v308
    %v326 = vadd.s32 %v320, %v309
    %v327 = vadd.s32 %v320, %v310
    %v328 = vadd.s32 %v320, %v311
    %v329 = vadd.s32 %v320, %v312
    %v330 = vadd.s32 %v320, %v313
    %v331 = vadd.s32 %v320, %v314
    %v332 = vadd.s32 %v320, %v315
    %v333 = vadd.s32 %v320, %v316
    %v334 = vadd.s32 %v320, %v317
    %v335 = vadd.s32 %v320, %v318
    %v336 = vadd.s32 %v320, %v319
    %s337 = smul.u32 0, 128
    %v338 = vlaneseq
    %v339 = vand.u32 %v338, 127
    %v340 = vstv %s337
    %v341 = vadd.s32 %v340, %v339
    %vm342 = vcmp.eq.s32.totalorder %v321, %v341
    %vm343 = vcmp.eq.s32.totalorder %v322, %v341
    %vm344 = vcmp.eq.s32.totalorder %v323, %v341
    %vm345 = vcmp.eq.s32.totalorder %v324, %v341
    %vm346 = vcmp.eq.s32.totalorder %v325, %v341
    %vm347 = vcmp.eq.s32.totalorder %v326, %v341
    %vm348 = vcmp.eq.s32.totalorder %v327, %v341
    %vm349 = vcmp.eq.s32.totalorder %v328, %v341
    %vm350 = vcmp.eq.s32.totalorder %v329, %v341
    %vm351 = vcmp.eq.s32.totalorder %v330, %v341
    %vm352 = vcmp.eq.s32.totalorder %v331, %v341
    %vm353 = vcmp.eq.s32.totalorder %v332, %v341
    %vm354 = vcmp.eq.s32.totalorder %v333, %v341
    %vm355 = vcmp.eq.s32.totalorder %v334, %v341
    %vm356 = vcmp.eq.s32.totalorder %v335, %v341
    %vm357 = vcmp.eq.s32.totalorder %v336, %v341
    %vm358 = vcmp.ge.s32.totalorder %v341, 8
    %vm359 = vmor %vm342, %vm358
    %vm360 = vmor %vm343, %vm358
    %vm361 = vmor %vm344, %vm358
    %vm362 = vmor %vm345, %vm358
    %vm363 = vmor %vm346, %vm358
    %vm364 = vmor %vm347, %vm358
    %vm365 = vmor %vm348, %vm358
    %vm366 = vmor %vm349, %vm358
    %vm367 = vmor %vm350, %vm358
    %vm368 = vmor %vm351, %vm358
    %vm369 = vmor %vm352, %vm358
    %vm370 = vmor %vm353, %vm358
    %vm371 = vmor %vm354, %vm358
    %vm372 = vmor %vm355, %vm358
    %vm373 = vmor %vm356, %vm358
    %vm374 = vmor %vm357, %vm358
    %v375 = vsel %vm359, -1e+30, %v240
    %v376 = vsel %vm360, -1e+30, %v243
    %v377 = vsel %vm361, -1e+30, %v248
    %v378 = vsel %vm362, -1e+30, %v251
    %v379 = vsel %vm363, -1e+30, %v256
    %v380 = vsel %vm364, -1e+30, %v259
    %v381 = vsel %vm365, -1e+30, %v264
    %v382 = vsel %vm366, -1e+30, %v267
    %v383 = vsel %vm367, -1e+30, %v272
    %v384 = vsel %vm368, -1e+30, %v275
    %v385 = vsel %vm369, -1e+30, %v280
    %v386 = vsel %vm370, -1e+30, %v283
    %v387 = vsel %vm371, -1e+30, %v288
    %v388 = vsel %vm372, -1e+30, %v291
    %v389 = vsel %vm373, -1e+30, %v296
    %v390 = vsel %vm374, -1e+30, %v299
    %v391 = vld [vmem:[#allocation2] sm:$0xff]
    %v392 = vld [vmem:[#allocation2 + $0x8] sm:$0xff]
    %v393 = vld [vmem:[#allocation2 + $0x10] sm:$0xff]
    %v394 = vld [vmem:[#allocation2 + $0x18] sm:$0xff]
    %v395 = vld [vmem:[#allocation2 + $0x20] sm:$0xff]
    %v396 = vld [vmem:[#allocation2 + $0x28] sm:$0xff]
    %v397 = vld [vmem:[#allocation2 + $0x30] sm:$0xff]
    %v398 = vld [vmem:[#allocation2 + $0x38] sm:$0xff]
    %v399 = vld [vmem:[#allocation2 + $0x40] sm:$0xff]
    %v400 = vld [vmem:[#allocation2 + $0x48] sm:$0xff]
    %v401 = vld [vmem:[#allocation2 + $0x50] sm:$0xff]
    %v402 = vld [vmem:[#allocation2 + $0x58] sm:$0xff]
    %v403 = vld [vmem:[#allocation2 + $0x60] sm:$0xff]
    %v404 = vld [vmem:[#allocation2 + $0x68] sm:$0xff]
    %v405 = vld [vmem:[#allocation2 + $0x70] sm:$0xff]
    %v406 = vld [vmem:[#allocation2 + $0x78] sm:$0xff]
    %407 = vmax.xlane.f32.xlu0 %v375
    %v408 = vpop.xlane.xlu0 %407
    %409 = vmax.xlane.f32.xlu0 %v376
    %v410 = vpop.xlane.xlu0 %409
    %411 = vmax.xlane.f32.xlu0 %v377
    %v412 = vpop.xlane.xlu0 %411
    %413 = vmax.xlane.f32.xlu0 %v378
    %v414 = vpop.xlane.xlu0 %413
    %415 = vmax.xlane.f32.xlu0 %v379
    %v416 = vpop.xlane.xlu0 %415
    %417 = vmax.xlane.f32.xlu0 %v380
    %v418 = vpop.xlane.xlu0 %417
    %419 = vmax.xlane.f32.xlu0 %v381
    %v420 = vpop.xlane.xlu0 %419
    %421 = vmax.xlane.f32.xlu0 %v382
    %v422 = vpop.xlane.xlu0 %421
    %423 = vmax.xlane.f32.xlu0 %v383
    %v424 = vpop.xlane.xlu0 %423
    %425 = vmax.xlane.f32.xlu0 %v384
    %v426 = vpop.xlane.xlu0 %425
    %427 = vmax.xlane.f32.xlu0 %v385
    %v428 = vpop.xlane.xlu0 %427
    %429 = vmax.xlane.f32.xlu0 %v386
    %v430 = vpop.xlane.xlu0 %429
    %431 = vmax.xlane.f32.xlu0 %v387
    %v432 = vpop.xlane.xlu0 %431
    %433 = vmax.xlane.f32.xlu0 %v388
    %v434 = vpop.xlane.xlu0 %433
    %435 = vmax.xlane.f32.xlu0 %v389
    %v436 = vpop.xlane.xlu0 %435
    %437 = vmax.xlane.f32.xlu0 %v390
    %v438 = vpop.xlane.xlu0 %437
    %v439 = vmax.f32 %v391, %v408
    %v440 = vmax.f32 %v392, %v410
    %v441 = vmax.f32 %v393, %v412
    %v442 = vmax.f32 %v394, %v414
    %v443 = vmax.f32 %v395, %v416
    %v444 = vmax.f32 %v396, %v418
    %v445 = vmax.f32 %v397, %v420
    %v446 = vmax.f32 %v398, %v422
    %v447 = vmax.f32 %v399, %v424
    %v448 = vmax.f32 %v400, %v426
    %v449 = vmax.f32 %v401, %v428
    %v450 = vmax.f32 %v402, %v430
    %v451 = vmax.f32 %v403, %v432
    %v452 = vmax.f32 %v404, %v434
    %v453 = vmax.f32 %v405, %v436
    %v454 = vmax.f32 %v406, %v438
    %v455 = vsub.f32 %v391, %v439
    %v456 = vsub.f32 %v392, %v440
    %v457 = vsub.f32 %v393, %v441
    %v458 = vsub.f32 %v394, %v442
    %v459 = vsub.f32 %v395, %v443
    %v460 = vsub.f32 %v396, %v444
    %v461 = vsub.f32 %v397, %v445
    %v462 = vsub.f32 %v398, %v446
    %v463 = vsub.f32 %v399, %v447
    %v464 = vsub.f32 %v400, %v448
    %v465 = vsub.f32 %v401, %v449
    %v466 = vsub.f32 %v402, %v450
    %v467 = vsub.f32 %v403, %v451
    %v468 = vsub.f32 %v404, %v452
    %v469 = vsub.f32 %v405, %v453
    %v470 = vsub.f32 %v406, %v454
    %v471 = vmul.f32 %v455, 1.442695
    %v472 = vpow.pop %v471
    %v473 = vmul.f32 %v456, 1.442695
    %v474 = vpow.pop %v473
    %v475 = vmul.f32 %v457, 1.442695
    %v476 = vpow.pop %v475
    %v477 = vmul.f32 %v458, 1.442695
    %v478 = vpow.pop %v477
    %v479 = vmul.f32 %v459, 1.442695
    %v480 = vpow.pop %v479
    %v481 = vmul.f32 %v460, 1.442695
    %v482 = vpow.pop %v481
    %v483 = vmul.f32 %v461, 1.442695
    %v484 = vpow.pop %v483
    %v485 = vmul.f32 %v462, 1.442695
    %v486 = vpow.pop %v485
    %v487 = vmul.f32 %v463, 1.442695
    %v488 = vpow.pop %v487
    %v489 = vmul.f32 %v464, 1.442695
    %v490 = vpow.pop %v489
    %v491 = vmul.f32 %v465, 1.442695
    %v492 = vpow.pop %v491
    %v493 = vmul.f32 %v466, 1.442695
    %v494 = vpow.pop %v493
    %v495 = vmul.f32 %v467, 1.442695
    %v496 = vpow.pop %v495
    %v497 = vmul.f32 %v468, 1.442695
    %v498 = vpow.pop %v497
    %v499 = vmul.f32 %v469, 1.442695
    %v500 = vpow.pop %v499
    %v501 = vmul.f32 %v470, 1.442695
    %v502 = vpow.pop %v501
    %504 = vset.pattern.permute.xlu0 0
    %505 = vperm.xlu0 %504, %v439
    %v506 = vpop.permute.xlu0 %505
    %509 = vset.pattern.permute.xlu0 0
    %510 = vperm.xlu0 %509, %v440
    %v511 = vpop.permute.xlu0 %510
    %514 = vset.pattern.permute.xlu0 0
    %515 = vperm.xlu0 %514, %v441
    %v516 = vpop.permute.xlu0 %515
    %519 = vset.pattern.permute.xlu0 0
    %520 = vperm.xlu0 %519, %v442
    %v521 = vpop.permute.xlu0 %520
    %524 = vset.pattern.permute.xlu0 0
    %525 = vperm.xlu0 %524, %v443
    %v526 = vpop.permute.xlu0 %525
    %529 = vset.pattern.permute.xlu0 0
    %530 = vperm.xlu0 %529, %v444
    %v531 = vpop.permute.xlu0 %530
    %534 = vset.pattern.permute.xlu0 0
    %535 = vperm.xlu0 %534, %v445
    %v536 = vpop.permute.xlu0 %535
    %539 = vset.pattern.permute.xlu0 0
    %540 = vperm.xlu0 %539, %v446
    %v541 = vpop.permute.xlu0 %540
    %544 = vset.pattern.permute.xlu0 0
    %545 = vperm.xlu0 %544, %v447
    %v546 = vpop.permute.xlu0 %545
    %549 = vset.pattern.permute.xlu0 0
    %550 = vperm.xlu0 %549, %v448
    %v551 = vpop.permute.xlu0 %550
    %554 = vset.pattern.permute.xlu0 0
    %555 = vperm.xlu0 %554, %v449
    %v556 = vpop.permute.xlu0 %555
    %559 = vset.pattern.permute.xlu0 0
    %560 = vperm.xlu0 %559, %v450
    %v561 = vpop.permute.xlu0 %560
    %564 = vset.pattern.permute.xlu0 0
    %565 = vperm.xlu0 %564, %v451
    %v566 = vpop.permute.xlu0 %565
    %569 = vset.pattern.permute.xlu0 0
    %570 = vperm.xlu0 %569, %v452
    %v571 = vpop.permute.xlu0 %570
    %574 = vset.pattern.permute.xlu0 0
    %575 = vperm.xlu0 %574, %v453
    %v576 = vpop.permute.xlu0 %575
    %579 = vset.pattern.permute.xlu0 0
    %580 = vperm.xlu0 %579, %v454
    %v581 = vpop.permute.xlu0 %580
    %v583 = vsub.f32 %v375, %v506
    %v584 = vsub.f32 %v376, %v511
    %v585 = vsub.f32 %v377, %v516
    %v586 = vsub.f32 %v378, %v521
    %v587 = vsub.f32 %v379, %v526
    %v588 = vsub.f32 %v380, %v531
    %v589 = vsub.f32 %v381, %v536
    %v590 = vsub.f32 %v382, %v541
    %v591 = vsub.f32 %v383, %v546
    %v592 = vsub.f32 %v384, %v551
    %v593 = vsub.f32 %v385, %v556
    %v594 = vsub.f32 %v386, %v561
    %v595 = vsub.f32 %v387, %v566
    %v596 = vsub.f32 %v388, %v571
    %v597 = vsub.f32 %v389, %v576
    %v598 = vsub.f32 %v390, %v581
    %v599 = vmul.f32 %v583, 1.442695
    %v600 = vpow.pop %v599
    %v601 = vmul.f32 %v584, 1.442695
    %v602 = vpow.pop %v601
    %v603 = vmul.f32 %v585, 1.442695
    %v604 = vpow.pop %v603
    %v605 = vmul.f32 %v586, 1.442695
    %v606 = vpow.pop %v605
    %v607 = vmul.f32 %v587, 1.442695
    %v608 = vpow.pop %v607
    %v609 = vmul.f32 %v588, 1.442695
    %v610 = vpow.pop %v609
    %v611 = vmul.f32 %v589, 1.442695
    %v612 = vpow.pop %v611
    %v613 = vmul.f32 %v590, 1.442695
    %v614 = vpow.pop %v613
    %v615 = vmul.f32 %v591, 1.442695
    %v616 = vpow.pop %v615
    %v617 = vmul.f32 %v592, 1.442695
    %v618 = vpow.pop %v617
    %v619 = vmul.f32 %v593, 1.442695
    %v620 = vpow.pop %v619
    %v621 = vmul.f32 %v594, 1.442695
    %v622 = vpow.pop %v621
    %v623 = vmul.f32 %v595, 1.442695
    %v624 = vpow.pop %v623
    %v625 = vmul.f32 %v596, 1.442695
    %v626 = vpow.pop %v625
    %v627 = vmul.f32 %v597, 1.442695
    %v628 = vpow.pop %v627
    %v629 = vmul.f32 %v598, 1.442695
    %v630 = vpow.pop %v629
    %v631 = vld [vmem:[#allocation3] sm:$0xff]
    %v632 = vld [vmem:[#allocation3 + $0x8] sm:$0xff]
    %v633 = vld [vmem:[#allocation3 + $0x10] sm:$0xff]
    %v634 = vld [vmem:[#allocation3 + $0x18] sm:$0xff]
    %v635 = vld [vmem:[#allocation3 + $0x20] sm:$0xff]
    %v636 = vld [vmem:[#allocation3 + $0x28] sm:$0xff]
    %v637 = vld [vmem:[#allocation3 + $0x30] sm:$0xff]
    %v638 = vld [vmem:[#allocation3 + $0x38] sm:$0xff]
    %v639 = vld [vmem:[#allocation3 + $0x40] sm:$0xff]
    %v640 = vld [vmem:[#allocation3 + $0x48] sm:$0xff]
    %v641 = vld [vmem:[#allocation3 + $0x50] sm:$0xff]
    %v642 = vld [vmem:[#allocation3 + $0x58] sm:$0xff]
    %v643 = vld [vmem:[#allocation3 + $0x60] sm:$0xff]
    %v644 = vld [vmem:[#allocation3 + $0x68] sm:$0xff]
    %v645 = vld [vmem:[#allocation3 + $0x70] sm:$0xff]
    %v646 = vld [vmem:[#allocation3 + $0x78] sm:$0xff]
    %v647 = vmul.f32 %v472, %v631
    %v648 = vmul.f32 %v474, %v632
    %v649 = vmul.f32 %v476, %v633
    %v650 = vmul.f32 %v478, %v634
    %v651 = vmul.f32 %v480, %v635
    %v652 = vmul.f32 %v482, %v636
    %v653 = vmul.f32 %v484, %v637
    %v654 = vmul.f32 %v486, %v638
    %v655 = vmul.f32 %v488, %v639
    %v656 = vmul.f32 %v490, %v640
    %v657 = vmul.f32 %v492, %v641
    %v658 = vmul.f32 %v494, %v642
    %v659 = vmul.f32 %v496, %v643
    %v660 = vmul.f32 %v498, %v644
    %v661 = vmul.f32 %v500, %v645
    %v662 = vmul.f32 %v502, %v646
    %663 = vadd.xlane.f32.xlu0 %v600
    %v664 = vpop.xlane.xlu0 %663
    %665 = vadd.xlane.f32.xlu0 %v602
    %v666 = vpop.xlane.xlu0 %665
    %667 = vadd.xlane.f32.xlu0 %v604
    %v668 = vpop.xlane.xlu0 %667
    %669 = vadd.xlane.f32.xlu0 %v606
    %v670 = vpop.xlane.xlu0 %669
    %671 = vadd.xlane.f32.xlu0 %v608
    %v672 = vpop.xlane.xlu0 %671
    %673 = vadd.xlane.f32.xlu0 %v610
    %v674 = vpop.xlane.xlu0 %673
    %675 = vadd.xlane.f32.xlu0 %v612
    %v676 = vpop.xlane.xlu0 %675
    %677 = vadd.xlane.f32.xlu0 %v614
    %v678 = vpop.xlane.xlu0 %677
    %679 = vadd.xlane.f32.xlu0 %v616
    %v680 = vpop.xlane.xlu0 %679
    %681 = vadd.xlane.f32.xlu0 %v618
    %v682 = vpop.xlane.xlu0 %681
    %683 = vadd.xlane.f32.xlu0 %v620
    %v684 = vpop.xlane.xlu0 %683
    %685 = vadd.xlane.f32.xlu0 %v622
    %v686 = vpop.xlane.xlu0 %685
    %687 = vadd.xlane.f32.xlu0 %v624
    %v688 = vpop.xlane.xlu0 %687
    %689 = vadd.xlane.f32.xlu0 %v626
    %v690 = vpop.xlane.xlu0 %689
    %691 = vadd.xlane.f32.xlu0 %v628
    %v692 = vpop.xlane.xlu0 %691
    %693 = vadd.xlane.f32.xlu0 %v630
    %v694 = vpop.xlane.xlu0 %693
    %v695 = vadd.f32 %v647, %v664
    %v696 = vadd.f32 %v648, %v666
    %v697 = vadd.f32 %v649, %v668
    %v698 = vadd.f32 %v650, %v670
    %v699 = vadd.f32 %v651, %v672
    %v700 = vadd.f32 %v652, %v674
    %v701 = vadd.f32 %v653, %v676
    %v702 = vadd.f32 %v654, %v678
    %v703 = vadd.f32 %v655, %v680
    %v704 = vadd.f32 %v656, %v682
    %v705 = vadd.f32 %v657, %v684
    %v706 = vadd.f32 %v658, %v686
    %v707 = vadd.f32 %v659, %v688
    %v708 = vadd.f32 %v660, %v690
    %v709 = vadd.f32 %v661, %v692
    %v710 = vadd.f32 %v662, %v694
    %vm711 = vcmask 7168
    %712 = vst.msk [vmem:[#allocation3] sm:$0xff] %vm711, %v695
    %713 = vst.msk [vmem:[#allocation3 + $0x8] sm:$0xff] %vm711, %v696
    %714 = vst.msk [vmem:[#allocation3 + $0x10] sm:$0xff] %vm711, %v697
    %715 = vst.msk [vmem:[#allocation3 + $0x18] sm:$0xff] %vm711, %v698
    %716 = vst.msk [vmem:[#allocation3 + $0x20] sm:$0xff] %vm711, %v699
    %717 = vst.msk [vmem:[#allocation3 + $0x28] sm:$0xff] %vm711, %v700
    %718 = vst.msk [vmem:[#allocation3 + $0x30] sm:$0xff] %vm711, %v701
    %719 = vst.msk [vmem:[#allocation3 + $0x38] sm:$0xff] %vm711, %v702
    %720 = vst.msk [vmem:[#allocation3 + $0x40] sm:$0xff] %vm711, %v703
    %721 = vst.msk [vmem:[#allocation3 + $0x48] sm:$0xff] %vm711, %v704
    %722 = vst.msk [vmem:[#allocation3 + $0x50] sm:$0xff] %vm711, %v705
    %723 = vst.msk [vmem:[#allocation3 + $0x58] sm:$0xff] %vm711, %v706
    %724 = vst.msk [vmem:[#allocation3 + $0x60] sm:$0xff] %vm711, %v707
    %725 = vst.msk [vmem:[#allocation3 + $0x68] sm:$0xff] %vm711, %v708
    %726 = vst.msk [vmem:[#allocation3 + $0x70] sm:$0xff] %vm711, %v709
    %727 = vst.msk [vmem:[#allocation3 + $0x78] sm:$0xff] %vm711, %v710
    %728 = vst.msk [vmem:[#allocation2] sm:$0xff] %vm711, %v439
    %729 = vst.msk [vmem:[#allocation2 + $0x8] sm:$0xff] %vm711, %v440
    %730 = vst.msk [vmem:[#allocation2 + $0x10] sm:$0xff] %vm711, %v441
    %731 = vst.msk [vmem:[#allocation2 + $0x18] sm:$0xff] %vm711, %v442
    %732 = vst.msk [vmem:[#allocation2 + $0x20] sm:$0xff] %vm711, %v443
    %733 = vst.msk [vmem:[#allocation2 + $0x28] sm:$0xff] %vm711, %v444
    %734 = vst.msk [vmem:[#allocation2 + $0x30] sm:$0xff] %vm711, %v445
    %735 = vst.msk [vmem:[#allocation2 + $0x38] sm:$0xff] %vm711, %v446
    %736 = vst.msk [vmem:[#allocation2 + $0x40] sm:$0xff] %vm711, %v447
    %737 = vst.msk [vmem:[#allocation2 + $0x48] sm:$0xff] %vm711, %v448
    %738 = vst.msk [vmem:[#allocation2 + $0x50] sm:$0xff] %vm711, %v449
    %739 = vst.msk [vmem:[#allocation2 + $0x58] sm:$0xff] %vm711, %v450
    %740 = vst.msk [vmem:[#allocation2 + $0x60] sm:$0xff] %vm711, %v451
    %741 = vst.msk [vmem:[#allocation2 + $0x68] sm:$0xff] %vm711, %v452
    %742 = vst.msk [vmem:[#allocation2 + $0x70] sm:$0xff] %vm711, %v453
    %743 = vst.msk [vmem:[#allocation2 + $0x78] sm:$0xff] %vm711, %v454
    // Predicated region
    $region22: #{tpu_custom_call.1} parent=1 // pred_check
      %p744 = pneg %p40
    $region23: #{tpu_custom_call.1} parent=1 // pred_check_branch
      %746 = sbr.rel (%p744) target = $region25
    $region24: #{tpu_custom_call.1} parent=1 // pred_region
      %v747 = vld [vmem:[#allocation2] sm:$0xff]
      %v748 = vld [vmem:[#allocation2 + $0x8] sm:$0xff]
      %v749 = vld [vmem:[#allocation2 + $0x10] sm:$0xff]
      %v750 = vld [vmem:[#allocation2 + $0x18] sm:$0xff]
      %v751 = vld [vmem:[#allocation2 + $0x20] sm:$0xff]
      %v752 = vld [vmem:[#allocation2 + $0x28] sm:$0xff]
      %v753 = vld [vmem:[#allocation2 + $0x30] sm:$0xff]
      %v754 = vld [vmem:[#allocation2 + $0x38] sm:$0xff]
      %v755 = vld [vmem:[#allocation2 + $0x40] sm:$0xff]
      %v756 = vld [vmem:[#allocation2 + $0x48] sm:$0xff]
      %v757 = vld [vmem:[#allocation2 + $0x50] sm:$0xff]
      %v758 = vld [vmem:[#allocation2 + $0x58] sm:$0xff]
      %v759 = vld [vmem:[#allocation2 + $0x60] sm:$0xff]
      %v760 = vld [vmem:[#allocation2 + $0x68] sm:$0xff]
      %v761 = vld [vmem:[#allocation2 + $0x70] sm:$0xff]
      %v762 = vld [vmem:[#allocation2 + $0x78] sm:$0xff]
      %v763 = vld [vmem:[#allocation3] sm:$0xff]
      %v764 = vld [vmem:[#allocation3 + $0x8] sm:$0xff]
      %v765 = vld [vmem:[#allocation3 + $0x10] sm:$0xff]
      %v766 = vld [vmem:[#allocation3 + $0x18] sm:$0xff]
      %v767 = vld [vmem:[#allocation3 + $0x20] sm:$0xff]
      %v768 = vld [vmem:[#allocation3 + $0x28] sm:$0xff]
      %v769 = vld [vmem:[#allocation3 + $0x30] sm:$0xff]
      %v770 = vld [vmem:[#allocation3 + $0x38] sm:$0xff]
      %v771 = vld [vmem:[#allocation3 + $0x40] sm:$0xff]
      %v772 = vld [vmem:[#allocation3 + $0x48] sm:$0xff]
      %v773 = vld [vmem:[#allocation3 + $0x50] sm:$0xff]
      %v774 = vld [vmem:[#allocation3 + $0x58] sm:$0xff]
      %v775 = vld [vmem:[#allocation3 + $0x60] sm:$0xff]
      %v776 = vld [vmem:[#allocation3 + $0x68] sm:$0xff]
      %v777 = vld [vmem:[#allocation3 + $0x70] sm:$0xff]
      %v778 = vld [vmem:[#allocation3 + $0x78] sm:$0xff]
      %v779 = vlog2.pop %v763
      %v780 = vmul.f32 %v779, 0.6931472
      %v781 = vlog2.pop %v764
      %v782 = vmul.f32 %v781, 0.6931472
      %v783 = vlog2.pop %v765
      %v784 = vmul.f32 %v783, 0.6931472
      %v785 = vlog2.pop %v766
      %v786 = vmul.f32 %v785, 0.6931472
      %v787 = vlog2.pop %v767
      %v788 = vmul.f32 %v787, 0.6931472
      %v789 = vlog2.pop %v768
      %v790 = vmul.f32 %v789, 0.6931472
      %v791 = vlog2.pop %v769
      %v792 = vmul.f32 %v791, 0.6931472
      %v793 = vlog2.pop %v770
      %v794 = vmul.f32 %v793, 0.6931472
      %v795 = vlog2.pop %v771
      %v796 = vmul.f32 %v795, 0.6931472
      %v797 = vlog2.pop %v772
      %v798 = vmul.f32 %v797, 0.6931472
      %v799 = vlog2.pop %v773
      %v800 = vmul.f32 %v799, 0.6931472
      %v801 = vlog2.pop %v774
      %v802 = vmul.f32 %v801, 0.6931472
      %v803 = vlog2.pop %v775
      %v804 = vmul.f32 %v803, 0.6931472
      %v805 = vlog2.pop %v776
      %v806 = vmul.f32 %v805, 0.6931472
      %v807 = vlog2.pop %v777
      %v808 = vmul.f32 %v807, 0.6931472
      %v809 = vlog2.pop %v778
      %v810 = vmul.f32 %v809, 0.6931472
      %v811 = vadd.f32 %v747, %v780
      %v812 = vadd.f32 %v748, %v782
      %v813 = vadd.f32 %v749, %v784
      %v814 = vadd.f32 %v750, %v786
      %v815 = vadd.f32 %v751, %v788
      %v816 = vadd.f32 %v752, %v790
      %v817 = vadd.f32 %v753, %v792
      %v818 = vadd.f32 %v754, %v794
      %v819 = vadd.f32 %v755, %v796
      %v820 = vadd.f32 %v756, %v798
      %v821 = vadd.f32 %v757, %v800
      %v822 = vadd.f32 %v758, %v802
      %v823 = vadd.f32 %v759, %v804
      %v824 = vadd.f32 %v760, %v806
      %v825 = vadd.f32 %v761, %v808
      %v826 = vadd.f32 %v762, %v810
      %827 = vst.msk [vmem:[%s2] sm:$0xff] %vm711, %v811
      %828 = vst.msk [vmem:[%s2 + $0x8] sm:$0xff] %vm711, %v812
      %829 = vst.msk [vmem:[%s2 + $0x10] sm:$0xff] %vm711, %v813
      %830 = vst.msk [vmem:[%s2 + $0x18] sm:$0xff] %vm711, %v814
      %831 = vst.msk [vmem:[%s2 + $0x20] sm:$0xff] %vm711, %v815
      %832 = vst.msk [vmem:[%s2 + $0x28] sm:$0xff] %vm711, %v816
      %833 = vst.msk [vmem:[%s2 + $0x30] sm:$0xff] %vm711, %v817
      %834 = vst.msk [vmem:[%s2 + $0x38] sm:$0xff] %vm711, %v818
      %835 = vst.msk [vmem:[%s2 + $0x40] sm:$0xff] %vm711, %v819
      %836 = vst.msk [vmem:[%s2 + $0x48] sm:$0xff] %vm711, %v820
      %837 = vst.msk [vmem:[%s2 + $0x50] sm:$0xff] %vm711, %v821
      %838 = vst.msk [vmem:[%s2 + $0x58] sm:$0xff] %vm711, %v822
      %839 = vst.msk [vmem:[%s2 + $0x60] sm:$0xff] %vm711, %v823
      %840 = vst.msk [vmem:[%s2 + $0x68] sm:$0xff] %vm711, %v824
      %841 = vst.msk [vmem:[%s2 + $0x70] sm:$0xff] %vm711, %v825
      %842 = vst.msk [vmem:[%s2 + $0x78] sm:$0xff] %vm711, %v826
    $region25: #{tpu_custom_call.1} parent=1 // pred_fallthru
      _
    // Predicated region
    $region26: #{tpu_custom_call.1} parent=1 // pred_check
      _
    $region27: #{tpu_custom_call.1} parent=1 // pred_check_branch
      %844 = sbr.rel (0) target = $region29
    $region28: #{tpu_custom_call.1} parent=1 // pred_region
      _
    $region29: #{tpu_custom_call.1} parent=1 // pred_fallthru
      _
    // Predicated region
    $region30: #{tpu_custom_call.1} parent=1 // pred_check
      _
    $region31: #{tpu_custom_call.1} parent=1 // pred_check_branch
      %846 = sbr.rel (0) target = $region33
    $region32: #{tpu_custom_call.1} parent=1 // pred_region
      _
    $region33: #{tpu_custom_call.1} parent=1 // pred_fallthru
      _
    %847 = vsyncpa [#allocation5], 1
    %848 = vsyncpa [#allocation7], 1

</llo_original>
